<compile_context>
chip_gen: v6e
topology: v6e:2x2x1
jax: 0.10.0
libtpu: 0.0.40
codegen_flags: <defaults>
</compile_context>

<pallas_src>
import functools
import math

import jax
import jax.numpy as jnp
from jax.experimental import pallas as pl
from jax.experimental.pallas import tpu as pltpu


def _round_up(a, b):
    return (a + b - 1) // b * b


def _label_smoothing_kernel(x_ref, tgt_ref, out_ref, *,
                            n_rows, n_cols, padding_idx,
                            confidence, base, conf_logconf, base_logbase,
                            mask_rows, mask_cols, fold_lanes):
    tn, tv = x_ref.shape
    x = x_ref[...].astype(jnp.float32)          # (tn, tv) log-probs (f32 math)
    tgt = tgt_ref[...]                          # (tn, 1) int32 class indices

    # Global column index of each lane in this V tile.
    col = (jax.lax.broadcasted_iota(jnp.int32, (tn, tv), 1)
           + pl.program_id(1) * tv)
    is_tgt = col == tgt                         # single full-tile compare

    # keep-mask: drop the padding_idx column, rows whose target == padding_idx,
    # and out-of-bounds rows/cols of overhanging boundary blocks (their VMEM
    # contents are garbage and MUST be select-masked, not multiplied by 0).
    row_keep = tgt != jnp.int32(padding_idx)    # (tn, 1)
    if mask_rows:
        row = (jax.lax.broadcasted_iota(jnp.int32, (tn, 1), 0)
               + pl.program_id(0) * tn)
        row_keep = jnp.logical_and(row_keep, row < n_rows)
    lane_keep = col != jnp.int32(padding_idx)   # (tn, tv)
    if mask_cols:
        lane_keep = jnp.logical_and(lane_keep, col < n_cols)
    keep = jnp.logical_and(row_keep, lane_keep)

    # true_dist only takes {0, base, confidence}; its xlogy term td*log(td) is a
    # constant per branch, so contrib = td*(log(td) - x) = td*log(td) - td*x with
    # both selects sharing the one is_tgt compare.  The final where() both zeroes
    # td==0 positions (xlogy convention, matching torch KLDivLoss) and guards
    # against NaN from -inf log-probs at masked positions.
    # (Degenerate smoothing in {0.0, 1.0} with x == -inf would still NaN; the
    # module is only meaningful for 0 < smoothing < 1.)
    scale = jnp.where(is_tgt, jnp.float32(confidence), jnp.float32(base))
    tlogt = jnp.where(is_tgt, jnp.float32(conf_logconf), jnp.float32(base_logbase))
    contrib = jnp.where(keep, tlogt - scale * x, jnp.float32(0.0))

    # VPU-only partial reduction: fold 8-row sublane groups (vreg-vreg adds,
    # layout-free reshape), then fold 128-lane groups with statically aligned
    # slices (one vreg each).  No XLU reduce inside the kernel; the final tiny
    # cross-lane sum happens once outside over the (n_tiles*8, v_tiles*128) slab.
    partial = contrib.reshape(tn // 8, 8, tv).sum(axis=0)      # (8, tv)
    if fold_lanes:
        acc = partial[:, 0:128]
        for g in range(1, tv // 128):
            acc = acc + partial[:, g * 128:(g + 1) * 128]
        out_ref[...] = acc                                      # (8, 128)
    else:
        out_ref[...] = partial                                  # (8, tv), tv = V


def label_smoothing_loss(x, target, *, size, padding_idx, smoothing,
                         tile_n=256, tile_v=2048):
    """x: (N, size) float (f32 or bf16) log-probs, target: (N,) int -> f32 loss."""
    N, V = x.shape
    assert V == size

    tgt = target.astype(jnp.int32)
    if N < 8:
        # Tiny corner case only: bring rows up to one sublane group.  Padded rows
        # get target == padding_idx, which the kernel drops (loss-neutral).
        pad = 8 - N
        x = jnp.pad(x, ((0, pad), (0, 0)))
        tgt = jnp.pad(tgt, (0, pad), constant_values=padding_idx)
        N = 8
    tgt2d = tgt.reshape(N, 1)

    # ---- row tiling (multiple of 8; no padding of x, boundary block masked) ---
    tile_n = max(8, (tile_n // 8) * 8)
    tn = min(tile_n, _round_up(N, 8))
    if pl.cdiv(N, tn) < 2 and N > 8:
        # v7x shards "parallel" grid axes across its 2 TensorCores: keep >= 2 steps.
        tn = max(8, _round_up(pl.cdiv(N, 2), 8))
    n_row_tiles = pl.cdiv(N, tn)
    mask_rows = (N % tn) != 0

    # ---- vocab (lane) tiling: multiple of 128, or the full V if it fits -------
    tile_v = max(128, (tile_v // 128) * 128)
    tv = V if V <= tile_v else tile_v
    n_v_tiles = pl.cdiv(V, tv)
    mask_cols = (V % tv) != 0
    fold_lanes = (tv % 128) == 0
    out_tv = 128 if fold_lanes else tv           # lane-dense output block width

    confidence = 1.0 - smoothing
    base = smoothing / (size - 2)
    conf_logconf = confidence * math.log(confidence) if confidence > 0.0 else 0.0
    base_logbase = base * math.log(base) if base > 0.0 else 0.0

    kernel = functools.partial(
        _label_smoothing_kernel,
        n_rows=N, n_cols=V, padding_idx=padding_idx,
        confidence=confidence, base=base,
        conf_logconf=conf_logconf, base_logbase=base_logbase,
        mask_rows=mask_rows, mask_cols=mask_cols, fold_lanes=fold_lanes)

    out_rows = n_row_tiles * 8
    out_cols = n_v_tiles * out_tv
    cost = pl.CostEstimate(
        flops=8 * N * V,
        transcendentals=0,
        bytes_accessed=N * V * x.dtype.itemsize + N * 4 + out_rows * out_cols * 4)

    partials = pl.pallas_call(
        kernel,
        out_shape=jax.ShapeDtypeStruct((out_rows, out_cols), jnp.float32),
        grid_spec=pltpu.PrefetchScalarGridSpec(
            num_scalar_prefetch=0,
            # V innermost: the (tn, 1) target block index is (i, 0) for all j,
            # so it stays resident (no re-DMA per vocab step).
            grid=(n_row_tiles, n_v_tiles),
            in_specs=[
                pl.BlockSpec((tn, tv), lambda i, j: (i, j)),
                pl.BlockSpec((tn, 1), lambda i, j: (i, 0)),
            ],
            out_specs=pl.BlockSpec((8, out_tv), lambda i, j: (i, j)),
        ),
        compiler_params=pltpu.CompilerParams(
            dimension_semantics=("parallel", "parallel"),
            # Explicit budget: fits v7x's 64 MiB physical VMEM with headroom and
            # lifts v5e's 16 MiB scoped default for the double-buffered blocks
            # plus the (tn, tv) f32 elementwise temporaries (tn<=512 keeps those
            # bounded well under this limit).
            vmem_limit_bytes=48 * 1024 * 1024),
        cost_estimate=cost,
    )(x, tgt2d)

    # Single tiny final reduce (plain XLA) over the per-tile lane-dense partials.
    return jnp.sum(partials)


def _reference_loss(x, target, *, size, padding_idx, smoothing):
    """Pure-JAX reference mirroring the PyTorch module."""
    N, V = x.shape
    confidence = 1.0 - smoothing
    td = jnp.full((N, V), smoothing / (size - 2), dtype=jnp.float32)
    td = td.at[jnp.arange(N), target].set(confidence)
    td = td.at[:, padding_idx].set(0.0)
    td = jnp.where((target == padding_idx)[:, None], 0.0, td)
    safe = jnp.where(td > 0, td, 1.0)
    return jnp.sum(jnp.where(td > 0, td * (jnp.log(safe) - x.astype(jnp.float32)), 0.0))


if __name__ == "__main__":
    key = jax.random.PRNGKey(0)
    N, V = 16, 128            # 16 samples, vocab/class size 128
    padding_idx = 0
    smoothing = 0.1

    k1, k2 = jax.random.split(key)
    logits = jax.random.normal(k1, (N, V), dtype=jnp.float32)
    x = jax.nn.log_softmax(logits, axis=-1)           # module expects log-probs
    target = jax.random.randint(k2, (N,), 0, V, dtype=jnp.int32)
    # make sure a couple of rows hit the padding_idx path
    target = target.at[3].set(padding_idx).at[7].set(padding_idx)

    loss = label_smoothing_loss(
        x, target, size=V, padding_idx=padding_idx, smoothing=smoothing)
    loss = jax.block_until_ready(loss)

    ref = _reference_loss(
        x, target, size=V, padding_idx=padding_idx, smoothing=smoothing)
    assert jnp.allclose(loss, ref, rtol=1e-5, atol=1e-5), (loss, ref)

    print("KERNEL_OK")
</pallas_src>

<mosaic_0001>
module attributes {stable_mosaic.version = 11 : i64} {
  func.func @_label_smoothing_kernel(%arg0: i32, %arg1: i32, %arg2: memref<8x128xf32, #tpu.memory_space<vmem>>, %arg3: memref<8x1xi32, #tpu.memory_space<vmem>>, %arg4: memref<8x128xf32, #tpu.memory_space<vmem>>) attributes {dimension_semantics = [#tpu.dimension_semantics<parallel>, #tpu.dimension_semantics<parallel>], iteration_bounds = array<i64: 2, 1>, scalar_prefetch = 0 : i64, scratch_operands = 0 : i64, tpu.core_type = #tpu.core_type<tc>, window_params = [{transform_indices = @transform_0, window_bounds = array<i64: 8, 128>}, {transform_indices = @transform_1, window_bounds = array<i64: 8, 1>}, {transform_indices = @transform_2, window_bounds = array<i64: 8, 128>}]} {
    %c0 = arith.constant 0 : index
    %c0_0 = arith.constant 0 : index
    %0 = vector.load %arg2[%c0, %c0_0] : memref<8x128xf32, #tpu.memory_space<vmem>>, vector<8x128xf32>
    %c0_1 = arith.constant 0 : index
    %c0_2 = arith.constant 0 : index
    %1 = vector.load %arg3[%c0_1, %c0_2] : memref<8x1xi32, #tpu.memory_space<vmem>>, vector<8x1xi32>
    %2 = tpu.iota {dimensions = array<i32: 1>} : vector<8x128xi32>
    %c128_i32 = arith.constant 128 : i32
    %3 = arith.muli %arg1, %c128_i32 : i32
    %4 = vector.broadcast %3 : i32 to vector<8x128xi32>
    %5 = arith.addi %2, %4 : vector<8x128xi32>
    %6 = vector.broadcast %1 : vector<8x1xi32> to vector<8x128xi32>
    %7 = arith.cmpi eq, %5, %6 : vector<8x128xi32>
    %c0_i32 = arith.constant 0 : i32
    %8 = vector.broadcast %c0_i32 : i32 to vector<8x1xi32>
    %9 = arith.cmpi ne, %1, %8 : vector<8x1xi32>
    %c0_i32_3 = arith.constant 0 : i32
    %10 = vector.broadcast %c0_i32_3 : i32 to vector<8x128xi32>
    %11 = arith.cmpi ne, %5, %10 : vector<8x128xi32>
    %12 = vector.broadcast %9 : vector<8x1xi1> to vector<8x128xi1>
    %13 = arith.andi %12, %11 : vector<8x128xi1>
    %cst = arith.constant 0.899999976 : f32
    %cst_4 = arith.constant 7.93650805E-4 : f32
    %14 = vector.broadcast %cst : f32 to vector<8x128xf32>
    %15 = vector.broadcast %cst_4 : f32 to vector<8x128xf32>
    %16 = arith.select %7, %14, %15 : vector<8x128xi1>, vector<8x128xf32>
    %cst_5 = arith.constant -0.0948244631 : f32
    %cst_6 = arith.constant -0.00566576747 : f32
    %17 = vector.broadcast %cst_5 : f32 to vector<8x128xf32>
    %18 = vector.broadcast %cst_6 : f32 to vector<8x128xf32>
    %19 = arith.select %7, %17, %18 : vector<8x128xi1>, vector<8x128xf32>
    %20 = arith.mulf %16, %0 : vector<8x128xf32>
    %21 = arith.subf %19, %20 : vector<8x128xf32>
    %cst_7 = arith.constant 0.000000e+00 : f32
    %22 = vector.broadcast %cst_7 : f32 to vector<8x128xf32>
    %23 = arith.select %13, %21, %22 : vector<8x128xi1>, vector<8x128xf32>
    %24 = vector.shape_cast %23 : vector<8x128xf32> to vector<1x8x128xf32>
    %cst_8 = arith.constant dense<0.000000e+00> : vector<8x128xf32>
    %25 = vector.multi_reduction <add>, %24, %cst_8 [0] : vector<1x8x128xf32> to vector<8x128xf32>
    %c0_9 = arith.constant 0 : index
    %c0_10 = arith.constant 0 : index
    %26 = vector.load %arg4[%c0_9, %c0_10] : memref<8x128xf32, #tpu.memory_space<vmem>>, vector<8x128xf32>
    tpu.vector_store %arg4[%c0_9, %c0_10], %25 {strides = array<i32>} : memref<8x128xf32, #tpu.memory_space<vmem>>, vector<8x128xf32>,
    return
  }
  func.func @transform_0(%arg0: i32, %arg1: i32) -> (i32, i32) {
    %c0_i32 = arith.constant 0 : i32
    return %arg0, %arg1 : i32, i32
  }
  func.func @transform_1(%arg0: i32, %arg1: i32) -> (i32, i32) {
    %c0_i32 = arith.constant 0 : i32
    %c0_i32_0 = arith.constant 0 : i32
    return %arg0, %c0_i32 : i32, i32
  }
  func.func @transform_2(%arg0: i32, %arg1: i32) -> (i32, i32) {
    %c0_i32 = arith.constant 0 : i32
    return %arg0, %arg1 : i32, i32
  }
}

</mosaic_0001>

<llo_original>
// kernel: tpu_custom_call.1
$region0: #{tpu_custom_call.1}
  #allocation0 [shape = 'u32[]', space=smem, size = 0x4, offset = 0x4, fixed_abs, tag = 'smem constant byte address 0x4 - core index']
  #allocation1 [shape = 'u32[144,128]{1,0:T(1,128)}', space=vmem, size = 0x12000, scoped, tag = 'internal scratch']
  %s0 = inlined_call_operand.vmem [shape: f32[16,128], index: 0, kind: input, shape index: {}]
  %s1 = inlined_call_operand.vmem [shape: s32[16,1], index: 1, kind: input, shape index: {}]
  %s2 = inlined_call_operand.hbm [shape: f32[16,128], index: 2, kind: output, shape index: {}]
  %s3 = sld [smem:[#allocation0]]
  $region41: #{tpu_custom_call.1} parent=0
    _
  %s5 = ssub.s32 1, %s3
  %s6 = scalar_select 0, %s5, %s3
  $region1: #{tpu_custom_call.1} parent=0
    #allocation2 [shape = 'u8[8192]{0}', space=vmem, size = 0x2000, scoped, tag = 'output window, operand 0']
    #allocation3 [shape = 's32[2]{0}', space=sflag, size = 0x8, scoped, tag = 'scoped memory for tpu_custom_call.1']
    %7 = vsyncpa [#allocation3], 0
    %s8 = scalar_lea.sflag [#allocation3], 1
    %9 = vsyncpa %s8, 0
    loop: start=0, step=1, limit=4
    $region2: #{tpu_custom_call.1} parent=1 // loop_pre_header
      _
    $region3: #{tpu_custom_call.1} parent=1 // loop_header
      %s11 = sphi 0, %s15
      %p12 = scmp.ge.s32.totalorder %s11, 4
      %s18 = sphi 0, %s30
      %s19 = sphi 0, %s26
      %s20 = sphi 0, %s18
      %s21 = sphi 0, %s19
      %s22 = sphi 0, %s20
      %s23 = sphi 0, %s21
      %s35 = sphi 0, %s37
      %s38 = sphi 0, %s35
      %s39 = sphi 0, %s38
      %s55 = sphi 0, %s39
      %s61 = sphi 0, %s63
      %s64 = sphi 0, %s61
      %s65 = sphi 0, %s64
      %s81 = sphi 0, %s65
      %s89 = sphi 0, %s91
      %s92 = sphi 0, %s89
      %s93 = sphi 0, %s92
      %s109 = sphi 0, %s93
    $region4: #{tpu_custom_call.1} parent=1 // loop_header_branch
      %14 = sbr.rel (%p12) target = $region8
    $region5: #{tpu_custom_call.1} parent=1 // loop_body
      %s16 = ssub.s32 %s11, 1
      %s17 = ssub.s32 %s11, 2
      %s24 = sadd.s32 1, %s19
      %p25 = scmp.ge.s32.totalorder %s24, 1
      %s26 = scalar_select %p25, 0, %s24
      %s27 = sadd.s32 1, %s18
      %s28 = scalar_select %p25, %s27, %s18
      %p29 = scmp.ge.s32.totalorder %s28, 2
      %s30 = scalar_select %p29, 0, %s28
      %s31 = ssub.s32 %s18, %s30
      %s32 = ssub.s32 %s19, %s26
      %s33 = sor.u32 %s31, %s32
      %p34 = scmp.eq.s32.totalorder %s33, 0
      %s36 = sadd.s32 %s35, 1
      %s37 = scalar_select %p34, %s35, %s36
      %p40 = pneg %p34
      %p41 = scmp.eq.s32.totalorder %s11, 1
      %p42 = por %p40, %p41
      %p43 = scmp.ne.s32.totalorder %s35, %s38
      %p44 = scmp.eq.s32.totalorder %s11, 0
      %p45 = por %p43, %p44
      %p46 = scmp.ne.s32.totalorder %s35, %s38
      %p47 = scmp.eq.s32.totalorder %s16, 1
      %p48 = por %p46, %p47
      %p49 = scmp.ne.s32.totalorder %s38, %s39
      %p50 = scmp.eq.s32.totalorder %s16, 0
      %p51 = por %p49, %p50
      %p52 = scmp.ne.s32.totalorder %s38, %s39
      %p53 = scmp.eq.s32.totalorder %s17, 1
      %p54 = por %p52, %p53
      %p56 = scmp.ne.s32.totalorder %s39, %s55
      %p57 = scmp.eq.s32.totalorder %s17, 0
      %p58 = por %p56, %p57
      %s59 = ssub.s32 %s18, %s30
      %p60 = scmp.eq.s32.totalorder %s59, 0
      %s62 = sadd.s32 %s61, 1
      %s63 = scalar_select %p60, %s61, %s62
      %p66 = pneg %p60
      %p67 = scmp.eq.s32.totalorder %s11, 1
      %p68 = por %p66, %p67
      %p69 = scmp.ne.s32.totalorder %s61, %s64
      %p70 = scmp.eq.s32.totalorder %s11, 0
      %p71 = por %p69, %p70
      %p72 = scmp.ne.s32.totalorder %s61, %s64
      %p73 = scmp.eq.s32.totalorder %s16, 1
      %p74 = por %p72, %p73
      %p75 = scmp.ne.s32.totalorder %s64, %s65
      %p76 = scmp.eq.s32.totalorder %s16, 0
      %p77 = por %p75, %p76
      %p78 = scmp.ne.s32.totalorder %s64, %s65
      %p79 = scmp.eq.s32.totalorder %s17, 1
      %p80 = por %p78, %p79
      %p82 = scmp.ne.s32.totalorder %s65, %s81
      %p83 = scmp.eq.s32.totalorder %s17, 0
      %p84 = por %p82, %p83
      %s85 = ssub.s32 %s18, %s30
      %s86 = ssub.s32 %s19, %s26
      %s87 = sor.u32 %s85, %s86
      %p88 = scmp.eq.s32.totalorder %s87, 0
      %s90 = sadd.s32 %s89, 1
      %s91 = scalar_select %p88, %s89, %s90
      %p94 = pneg %p88
      %p95 = scmp.eq.s32.totalorder %s11, 1
      %p96 = por %p94, %p95
      %p97 = scmp.ne.s32.totalorder %s89, %s92
      %p98 = scmp.eq.s32.totalorder %s11, 0
      %p99 = por %p97, %p98
      %p100 = scmp.ne.s32.totalorder %s89, %s92
      %p101 = scmp.eq.s32.totalorder %s16, 1
      %p102 = por %p100, %p101
      %p103 = scmp.ne.s32.totalorder %s92, %s93
      %p104 = scmp.eq.s32.totalorder %s16, 0
      %p105 = por %p103, %p104
      %p106 = scmp.ne.s32.totalorder %s92, %s93
      %p107 = scmp.eq.s32.totalorder %s17, 1
      %p108 = por %p106, %p107
      %p110 = scmp.ne.s32.totalorder %s93, %s109
      %p111 = scmp.eq.s32.totalorder %s17, 0
      %p112 = por %p110, %p111
      %p113 = scmp.le.s32.totalorder 1, %s11
      %p114 = scmp.lt.s32.totalorder %s11, 3
      %p115 = pnand %p113, %p114
      %p116 = pneg %p115
      // Predicated region
      $region9: #{tpu_custom_call.1} parent=5 // pred_check
        _
      $region10: #{tpu_custom_call.1} parent=5 // pred_check_branch
        %118 = sbr.rel (%p115) target = $region12
      $region11: #{tpu_custom_call.1} parent=5 // pred_region
        %s119 = ssub.s32 %s11, 1
      $region12: #{tpu_custom_call.1} parent=5 // pred_fallthru
        _
      %p120 = scmp.lt.s32.totalorder %s11, 2
      // Predicated region
      $region13: #{tpu_custom_call.1} parent=5 // pred_check
        %p121 = pneg %p120
      $region14: #{tpu_custom_call.1} parent=5 // pred_check_branch
        %123 = sbr.rel (%p121) target = $region16
      $region15: #{tpu_custom_call.1} parent=5 // pred_region
        // Predicated region
        $region17: #{tpu_custom_call.1} parent=15 // pred_check
          %p124 = pneg %p45
        $region18: #{tpu_custom_call.1} parent=15 // pred_check_branch
          %126 = sbr.rel (%p124) target = $region20
        $region19: #{tpu_custom_call.1} parent=15 // pred_region
          %p127 = scmp.lt.s32.totalorder %s18, 1
          %s128 = scalar_select %p127, %s18, 1
          %p129 = scmp.lt.s32.totalorder %s19, 0
          %s130 = scalar_select %p129, %s19, 0
          %s131 = sadd.s32 %s130, %s128
          %s132 = smul.addr %s131, 8
          %s133 = scalar_lea.vmem %s0, %s132
        $region20: #{tpu_custom_call.1} parent=15 // pred_fallthru
          _
        // Predicated region
        $region21: #{tpu_custom_call.1} parent=15 // pred_check
          %p134 = pneg %p71
        $region22: #{tpu_custom_call.1} parent=15 // pred_check_branch
          %136 = sbr.rel (%p134) target = $region24
        $region23: #{tpu_custom_call.1} parent=15 // pred_region
          %p137 = scmp.lt.s32.totalorder %s18, 1
          %s138 = scalar_select %p137, %s18, 1
          %s139 = smul.addr %s138, 8
          %s140 = scalar_lea.vmem %s1, %s139
        $region24: #{tpu_custom_call.1} parent=15 // pred_fallthru
          _
      $region16: #{tpu_custom_call.1} parent=5 // pred_fallthru
        _
      %p141 = scmp.le.s32.totalorder 1, %s11
      %p142 = scmp.lt.s32.totalorder %s11, 3
      %p143 = pnand %p141, %p142
      %p144 = pneg %p143
      // Predicated region
      $region25: #{tpu_custom_call.1} parent=5 // pred_check
        _
      $region26: #{tpu_custom_call.1} parent=5 // pred_check_branch
        %146 = sbr.rel (%p143) target = $region28
      $region27: #{tpu_custom_call.1} parent=5 // pred_region
        %s147 = ssub.s32 %s11, 1
        %p148 = scmp.lt.s32.totalorder %s20, 1
        %s149 = scalar_select %p148, %s20, 1
        %p150 = scmp.lt.s32.totalorder %s21, 0
        %s151 = scalar_select %p150, %s21, 0
        %s152 = sadd.s32 %s151, %s149
        %s153 = smul.addr %s152, 8
        %s154 = scalar_lea.vmem %s0, %s153
        %p155 = pneg %p51
        %p156 = pneg %p48
        %p157 = scmp.lt.s32.totalorder %s20, 1
        %s158 = scalar_select %p157, %s20, 1
        %s159 = smul.addr %s158, 8
        %s160 = scalar_lea.vmem %s1, %s159
        %p161 = pneg %p77
        %p162 = pneg %p74
        %p163 = pneg %p105
        %p164 = pneg %p102
        %s165 = sand.u32 %s92, 1
        %s166 = scalar_lea.sflag [#allocation3], %s165
        %s167 = sand.u32 %s92, 1
        %s168 = smul.addr %s167, 8
        %s169 = scalar_lea.vmem [#allocation2], %s168
        %p170 = scmp.lt.s32.totalorder %s20, 1
        %s171 = scalar_select %p170, %s20, 1
        %p172 = scmp.lt.s32.totalorder %s21, 0
        %s173 = scalar_select %p172, %s21, 0
        %s174 = sadd.s32 %s173, %s171
        %s175 = smul.addr %s174, 8
        %s176 = scalar_lea.vmem %s0, %s175
        %p177 = scmp.lt.s32.totalorder %s20, 1
        %s178 = scalar_select %p177, %s20, 1
        %s179 = smul.addr %s178, 8
        %s180 = scalar_lea.vmem %s1, %s179
        %v181 = vld [vmem:[%s176] sm:$0xff]
        %v182 = vld [vmem:[%s180] sm:$0xff]
        %v183 = vlaneseq
        %v184 = vand.u32 %v183, 127
        %s185 = smul.u32 %s21, 128
        %v186 = vstv %s185
        %v187 = vadd.s32 %v184, %v186
        %188 = vset.pattern.permute.xlu0 0
        %189 = vperm.xlu0 %188, %v182
        %v190 = vpop.permute.xlu0 %189
        %vm191 = vcmp.eq.s32.totalorder %v187, %v190
        %vm192 = vcmp.ne.s32.totalorder %v182, 0
        %vm193 = vcmp.ne.s32.totalorder %v187, 0
        %v194 = vsel %vm192, 1, 0
        %195 = vset.pattern.permute.xlu0 0
        %196 = vperm.xlu0 %195, %v194
        %v197 = vpop.permute.xlu0 %196
        %vm198 = vcmp.eq.s32.totalorder %v197, 1
        %vm199 = vmand %vm198, %vm193
        %v200 = vsel %vm191, 0.9, 0.0007936508
        %v201 = vsel %vm191, -0.09482446, -0.0056657675
        %v202 = vmul.f32 %v200, %v181
        %v203 = vsub.f32 %v201, %v202
        %v204 = vsel %vm199, %v203, 0.0
        %v205 = vadd.f32 %v204, 0.0
        %206 = vst [vmem:[%s169] sm:$0xff] %v205
        %s207 = sand.u32 %s92, 1
        %s208 = scalar_lea.sflag [#allocation3], %s207
        %s209 = sand.u32 %s92, 1
        %s210 = smul.addr %s209, 8
        %s211 = scalar_lea.vmem [#allocation2], %s210
        // Predicated region
        $region29: #{tpu_custom_call.1} parent=27 // pred_check
          %p212 = pneg %p102
        $region30: #{tpu_custom_call.1} parent=27 // pred_check_branch
          %214 = sbr.rel (%p212) target = $region32
        $region31: #{tpu_custom_call.1} parent=27 // pred_region
          %s216 = ssub.s32 128, 128
          %217 = vsyncadd %s208, %s216
          %s218 = sadd.s32 %s21, %s20
          %s219 = smul.addr %s218, 128
          %s220 = scalar_lea.hbm %s2, %s219
          %s222 = sshll.u32 %s211, 4
          %s223 = int_to_ptr.vmem [resolvable:$true] %s222
          %225 = dma.vmem_to_hbm [thread:$0]  %s223, 128, %s220, %s208
        $region32: #{tpu_custom_call.1} parent=27 // pred_fallthru
          _
      $region28: #{tpu_custom_call.1} parent=5 // pred_fallthru
        _
      %p226 = scmp.le.s32.totalorder 2, %s11
      // Predicated region
      $region33: #{tpu_custom_call.1} parent=5 // pred_check
        %p227 = pneg %p226
      $region34: #{tpu_custom_call.1} parent=5 // pred_check_branch
        %229 = sbr.rel (%p227) target = $region36
      $region35: #{tpu_custom_call.1} parent=5 // pred_region
        %s230 = ssub.s32 %s11, 2
        // Predicated region
        $region37: #{tpu_custom_call.1} parent=35 // pred_check
          %p231 = pneg %p108
        $region38: #{tpu_custom_call.1} parent=35 // pred_check_branch
          %233 = sbr.rel (%p231) target = $region40
        $region39: #{tpu_custom_call.1} parent=35 // pred_region
          %s234 = sand.u32 %s93, 1
          %s235 = scalar_lea.sflag [#allocation3], %s234
          %s236 = sand.u32 %s93, 1
          %s237 = smul.addr %s236, 8
          %s238 = scalar_lea.vmem [#allocation2], %s237
          %239 = dma.done %s235, 128
        $region40: #{tpu_custom_call.1} parent=35 // pred_fallthru
          _
      $region36: #{tpu_custom_call.1} parent=5 // pred_fallthru
        _
    $region6: #{tpu_custom_call.1} parent=1 // loop_footer
      %s15 = sadd.s32 1, %s11
    $region7: #{tpu_custom_call.1} parent=1 // loop_footer_branch
      %10 = sbr.rel target = $region3
    $region8: #{tpu_custom_call.1} parent=1 // loop_exit
      _
    %240 = vsyncpa [#allocation3], 1
    %s241 = scalar_lea.sflag [#allocation3], 1
    %242 = vsyncpa %s241, 1

</llo_original>
